<compile_context>
chip_gen: v6e
topology: v6e:2x2x1
jax: 0.10.0
libtpu: 0.0.40
codegen_flags: <defaults>
</compile_context>

<pallas_src>
import functools
import math

import jax
import jax.numpy as jnp
from jax.experimental import pallas as pl
from jax.experimental.pallas import tpu as pltpu


def _round_up(x, m):
    return (x + m - 1) // m * m


def _mlp_kernel(num_layers, *refs):
    """refs = (x_ref, w0_ref, b0_ref, w1_ref, b1_ref, ..., o_ref).

    x_ref: (TM, in_dim).  w_i: (in_i, out_i).  b_i: (1, out_i).
    o_ref: (TM, out_dim).
    """
    x_ref = refs[0]
    o_ref = refs[1 + 2 * num_layers]

    y = x_ref[...].astype(jnp.float32)
    for i in range(num_layers):
        w_ref = refs[1 + 2 * i]
        b_ref = refs[2 + 2 * i]
        # Single MXU matmul per layer, f32 accumulation.
        y = jnp.dot(y, w_ref[...].astype(jnp.float32),
                    preferred_element_type=jnp.float32)
        y = y + b_ref[...].astype(jnp.float32)          # (1, out) broadcast
        if i < num_layers - 1:                          # ReLU except last layer
            y = jnp.maximum(y, 0.0)
    o_ref[...] = y.astype(o_ref.dtype)


def mlp_forward(x, params, *, tile_m=256):
    """x: (..., input_dim) float32.  params: list of (W (in, out), b (out,)).

    Returns (..., output_dim), matching the PyTorch MLP forward pass.
    """
    num_layers = len(params)
    in_dim = params[0][0].shape[0]
    out_dim = params[-1][0].shape[1]

    lead = x.shape[:-1]
    m = int(math.prod(lead)) if lead else 1
    x2d = x.reshape(m, in_dim)

    # Tile M; keep the tile a multiple of 8 (sublane) and pad M up to a whole
    # number of tiles.  For small inputs this collapses to a single tile.
    tm = min(tile_m, _round_up(m, 8))
    m_pad = _round_up(m, tm)
    if m_pad != m:
        x2d = jnp.pad(x2d, ((0, m_pad - m), (0, 0)))

    grid = (m_pad // tm,)

    in_specs = [pl.BlockSpec((tm, in_dim), lambda i: (i, 0))]
    flat_args = [x2d]
    for w, b in params:
        cin, cout = w.shape
        # Whole (small) weight / bias resident in VMEM for every grid step.
        in_specs.append(pl.BlockSpec((cin, cout), lambda i: (0, 0)))
        in_specs.append(pl.BlockSpec((1, cout), lambda i: (0, 0)))
        flat_args.append(w)
        flat_args.append(b.reshape(1, cout))

    out_specs = pl.BlockSpec((tm, out_dim), lambda i: (i, 0))

    out = pl.pallas_call(
        functools.partial(_mlp_kernel, num_layers),
        out_shape=jax.ShapeDtypeStruct((m_pad, out_dim), x.dtype),
        grid_spec=pltpu.PrefetchScalarGridSpec(
            num_scalar_prefetch=0,
            grid=grid,
            in_specs=in_specs,
            out_specs=out_specs,
        ),
        compiler_params=pltpu.CompilerParams(
            dimension_semantics=("parallel",)),
    )(*flat_args)

    return out[:m].reshape(*lead, out_dim)


def init_params(key, input_dim, hidden_dim, output_dim, num_layers):
    """Mirrors the PyTorch module: xavier_uniform on weights (dim > 1),
    default nn.Linear uniform init on biases.  Weights stored (in, out)."""
    dims = [input_dim] + [hidden_dim] * (num_layers - 1) + [output_dim]
    params = []
    for i in range(num_layers):
        key, kw, kb = jax.random.split(key, 3)
        fan_in, fan_out = dims[i], dims[i + 1]
        limit = math.sqrt(6.0 / (fan_in + fan_out))
        w = jax.random.uniform(kw, (fan_in, fan_out), jnp.float32,
                               -limit, limit)
        bound = 1.0 / math.sqrt(fan_in)
        b = jax.random.uniform(kb, (fan_out,), jnp.float32, -bound, bound)
        params.append((w, b))
    return params


def reference(x, params):
    """Pure-JAX reference for a correctness check."""
    y = x
    n = len(params)
    for i, (w, b) in enumerate(params):
        y = jnp.dot(y, w, preferred_element_type=jnp.float32) + b
        if i < n - 1:
            y = jnp.maximum(y, 0.0)
    return y.astype(x.dtype)


if __name__ == "__main__":
    # Small shapes consistent with the module: (batch=2, seq=8, input_dim=32),
    # hidden_dim=32, output_dim=8, num_layers=3.
    B, S = 2, 8
    input_dim, hidden_dim, output_dim, num_layers = 32, 32, 8, 3

    key = jax.random.PRNGKey(0)
    kx, kp = jax.random.split(key)
    x = jax.random.normal(kx, (B, S, input_dim), jnp.float32)
    params = init_params(kp, input_dim, hidden_dim, output_dim, num_layers)

    out = jax.block_until_ready(mlp_forward(x, params))
    ref = jax.block_until_ready(reference(x, params))

    assert out.shape == (B, S, output_dim)
    assert jnp.allclose(out, ref, atol=1e-4, rtol=1e-4), "mismatch vs reference"

    print("KERNEL_OK")
</pallas_src>

<mosaic_0001>
module attributes {stable_mosaic.version = 11 : i64} {
  func.func @_mlp_kernel(%arg0: i32, %arg1: memref<16x32xf32, #tpu.memory_space<vmem>>, %arg2: memref<32x32xf32, #tpu.memory_space<vmem>>, %arg3: memref<1x32xf32, #tpu.memory_space<vmem>>, %arg4: memref<32x32xf32, #tpu.memory_space<vmem>>, %arg5: memref<1x32xf32, #tpu.memory_space<vmem>>, %arg6: memref<32x8xf32, #tpu.memory_space<vmem>>, %arg7: memref<1x8xf32, #tpu.memory_space<vmem>>, %arg8: memref<16x8xf32, #tpu.memory_space<vmem>>) attributes {dimension_semantics = [#tpu.dimension_semantics<parallel>], iteration_bounds = array<i64: 1>, scalar_prefetch = 0 : i64, scratch_operands = 0 : i64, tpu.core_type = #tpu.core_type<tc>, window_params = [{transform_indices = @transform_0, window_bounds = array<i64: 16, 32>}, {pipeline_mode = #tpu.pipeline_mode<synchronous>, transform_indices = @transform_1, window_bounds = array<i64: 32, 32>}, {pipeline_mode = #tpu.pipeline_mode<synchronous>, transform_indices = @transform_2, window_bounds = array<i64: 1, 32>}, {pipeline_mode = #tpu.pipeline_mode<synchronous>, transform_indices = @transform_3, window_bounds = array<i64: 32, 32>}, {pipeline_mode = #tpu.pipeline_mode<synchronous>, transform_indices = @transform_4, window_bounds = array<i64: 1, 32>}, {pipeline_mode = #tpu.pipeline_mode<synchronous>, transform_indices = @transform_5, window_bounds = array<i64: 32, 8>}, {pipeline_mode = #tpu.pipeline_mode<synchronous>, transform_indices = @transform_6, window_bounds = array<i64: 1, 8>}, {transform_indices = @transform_7, window_bounds = array<i64: 16, 8>}]} {
    %c0 = arith.constant 0 : index
    %c0_0 = arith.constant 0 : index
    %0 = vector.load %arg1[%c0, %c0_0] : memref<16x32xf32, #tpu.memory_space<vmem>>, vector<16x32xf32>
    %c0_1 = arith.constant 0 : index
    %c0_2 = arith.constant 0 : index
    %1 = vector.load %arg2[%c0_1, %c0_2] : memref<32x32xf32, #tpu.memory_space<vmem>>, vector<32x32xf32>
    %cst = arith.constant dense<0.000000e+00> : vector<16x32xf32>
    %2 = tpu.matmul %0, %1, %cst {dimension_numbers = #tpu.dot_dimension_numbers<[1], [0], [0], [1], [0, 0, 1, 1], [], []>} : vector<16x32xf32>, vector<32x32xf32>, vector<16x32xf32> -> vector<16x32xf32>
    %c0_3 = arith.constant 0 : index
    %c0_4 = arith.constant 0 : index
    %3 = vector.load %arg3[%c0_3, %c0_4] : memref<1x32xf32, #tpu.memory_space<vmem>>, vector<1x32xf32>
    %4 = vector.broadcast %3 : vector<1x32xf32> to vector<16x32xf32>
    %5 = arith.addf %2, %4 : vector<16x32xf32>
    %cst_5 = arith.constant 0.000000e+00 : f32
    %6 = vector.broadcast %cst_5 : f32 to vector<16x32xf32>
    %7 = arith.maximumf %5, %6 : vector<16x32xf32>
    %c0_6 = arith.constant 0 : index
    %c0_7 = arith.constant 0 : index
    %8 = vector.load %arg4[%c0_6, %c0_7] : memref<32x32xf32, #tpu.memory_space<vmem>>, vector<32x32xf32>
    %cst_8 = arith.constant dense<0.000000e+00> : vector<16x32xf32>
    %9 = tpu.matmul %7, %8, %cst_8 {dimension_numbers = #tpu.dot_dimension_numbers<[1], [0], [0], [1], [0, 0, 1, 1], [], []>} : vector<16x32xf32>, vector<32x32xf32>, vector<16x32xf32> -> vector<16x32xf32>
    %c0_9 = arith.constant 0 : index
    %c0_10 = arith.constant 0 : index
    %10 = vector.load %arg5[%c0_9, %c0_10] : memref<1x32xf32, #tpu.memory_space<vmem>>, vector<1x32xf32>
    %11 = vector.broadcast %10 : vector<1x32xf32> to vector<16x32xf32>
    %12 = arith.addf %9, %11 : vector<16x32xf32>
    %cst_11 = arith.constant 0.000000e+00 : f32
    %13 = vector.broadcast %cst_11 : f32 to vector<16x32xf32>
    %14 = arith.maximumf %12, %13 : vector<16x32xf32>
    %c0_12 = arith.constant 0 : index
    %c0_13 = arith.constant 0 : index
    %15 = vector.load %arg6[%c0_12, %c0_13] : memref<32x8xf32, #tpu.memory_space<vmem>>, vector<32x8xf32>
    %cst_14 = arith.constant dense<0.000000e+00> : vector<16x8xf32>
    %16 = tpu.matmul %14, %15, %cst_14 {dimension_numbers = #tpu.dot_dimension_numbers<[1], [0], [0], [1], [0, 0, 1, 1], [], []>} : vector<16x32xf32>, vector<32x8xf32>, vector<16x8xf32> -> vector<16x8xf32>
    %c0_15 = arith.constant 0 : index
    %c0_16 = arith.constant 0 : index
    %17 = vector.load %arg7[%c0_15, %c0_16] : memref<1x8xf32, #tpu.memory_space<vmem>>, vector<1x8xf32>
    %18 = vector.broadcast %17 : vector<1x8xf32> to vector<16x8xf32>
    %19 = arith.addf %16, %18 : vector<16x8xf32>
    %c0_17 = arith.constant 0 : index
    %c0_18 = arith.constant 0 : index
    %20 = vector.load %arg8[%c0_17, %c0_18] : memref<16x8xf32, #tpu.memory_space<vmem>>, vector<16x8xf32>
    tpu.vector_store %arg8[%c0_17, %c0_18], %19 {strides = array<i32>} : memref<16x8xf32, #tpu.memory_space<vmem>>, vector<16x8xf32>,
    return
  }
  func.func @transform_0(%arg0: i32) -> (i32, i32) {
    %c0_i32 = arith.constant 0 : i32
    %c0_i32_0 = arith.constant 0 : i32
    return %arg0, %c0_i32 : i32, i32
  }
  func.func @transform_1(%arg0: i32) -> (i32, i32) {
    %c0_i32 = arith.constant 0 : i32
    %c0_i32_0 = arith.constant 0 : i32
    %c0_i32_1 = arith.constant 0 : i32
    return %c0_i32, %c0_i32_0 : i32, i32
  }
  func.func @transform_2(%arg0: i32) -> (i32, i32) {
    %c0_i32 = arith.constant 0 : i32
    %c0_i32_0 = arith.constant 0 : i32
    %c0_i32_1 = arith.constant 0 : i32
    return %c0_i32, %c0_i32_0 : i32, i32
  }
  func.func @transform_3(%arg0: i32) -> (i32, i32) {
    %c0_i32 = arith.constant 0 : i32
    %c0_i32_0 = arith.constant 0 : i32
    %c0_i32_1 = arith.constant 0 : i32
    return %c0_i32, %c0_i32_0 : i32, i32
  }
  func.func @transform_4(%arg0: i32) -> (i32, i32) {
    %c0_i32 = arith.constant 0 : i32
    %c0_i32_0 = arith.constant 0 : i32
    %c0_i32_1 = arith.constant 0 : i32
    return %c0_i32, %c0_i32_0 : i32, i32
  }
  func.func @transform_5(%arg0: i32) -> (i32, i32) {
    %c0_i32 = arith.constant 0 : i32
    %c0_i32_0 = arith.constant 0 : i32
    %c0_i32_1 = arith.constant 0 : i32
    return %c0_i32, %c0_i32_0 : i32, i32
  }
  func.func @transform_6(%arg0: i32) -> (i32, i32) {
    %c0_i32 = arith.constant 0 : i32
    %c0_i32_0 = arith.constant 0 : i32
    %c0_i32_1 = arith.constant 0 : i32
    return %c0_i32, %c0_i32_0 : i32, i32
  }
  func.func @transform_7(%arg0: i32) -> (i32, i32) {
    %c0_i32 = arith.constant 0 : i32
    %c0_i32_0 = arith.constant 0 : i32
    return %arg0, %c0_i32 : i32, i32
  }
}

</mosaic_0001>

<llo_original>
// kernel: tpu_custom_call.1
$region0: #{tpu_custom_call.1}
  #allocation0 [shape = 'u32[]', space=smem, size = 0x4, offset = 0x4, fixed_abs, tag = 'smem constant byte address 0x4 - core index']
  #allocation1 [shape = 'u32[144,128]{1,0:T(1,128)}', space=vmem, size = 0x12000, scoped, tag = 'internal scratch']
  %s0 = inlined_call_operand.hbm [shape: f32[16,32], index: 0, kind: input, shape index: {}]
  %s1 = inlined_call_operand.vmem [shape: f32[32,32], index: 1, kind: input, shape index: {}]
  %s2 = inlined_call_operand.vmem [shape: f32[1,32], index: 2, kind: input, shape index: {}]
  %s3 = inlined_call_operand.hbm [shape: f32[32,32], index: 3, kind: input, shape index: {}]
  %s4 = inlined_call_operand.vmem [shape: f32[1,32], index: 4, kind: input, shape index: {}]
  %s5 = inlined_call_operand.vmem [shape: f32[32,8], index: 5, kind: input, shape index: {}]
  %s6 = inlined_call_operand.vmem [shape: f32[1,8], index: 6, kind: input, shape index: {}]
  %s7 = inlined_call_operand.vmem [shape: f32[16,8], index: 7, kind: output, shape index: {}]
  %s8 = sld [smem:[#allocation0]]
  $region46: #{tpu_custom_call.1} parent=0
    _
  %s10 = ssub.s32 1, %s8
  %s11 = scalar_select 0, %s10, %s8
  $region1: #{tpu_custom_call.1} parent=0
    #allocation2 [shape = 'u8[8192]{0}', space=vmem, size = 0x2000, scoped, tag = 'input window, operand 0, single buffered']
    #allocation3 [shape = 's32[1]{0}', space=sflag, size = 0x4, scoped, tag = 'scoped memory for tpu_custom_call.1']
    #allocation4 [shape = 'u8[16384]{0}', space=vmem, size = 0x4000, scoped, tag = 'input window, operand 3, single buffered']
    #allocation5 [shape = 's32[1]{0}', space=sflag, size = 0x4, scoped, tag = 'scoped memory for tpu_custom_call.1']
    %12 = vsyncpa [#allocation3], 0
    %13 = vsyncpa [#allocation5], 0
    // Predicated region
    $region2: #{tpu_custom_call.1} parent=1 // pred_check
      _
    $region3: #{tpu_custom_call.1} parent=1 // pred_check_branch
      %15 = sbr.rel (0) target = $region5
    $region4: #{tpu_custom_call.1} parent=1 // pred_region
      %s17 = ssub.s32 256, 256
      %18 = vsyncadd [#allocation3], %s17
      %s19 = sshll.u32 [#allocation2], 4
      %s20 = int_to_ptr.vmem [resolvable:$true] %s19
      %25 = dma.hbm_to_vmem [thread:$0]  %s0, 256, %s20, [#allocation3], 128, 128, 8
    $region5: #{tpu_custom_call.1} parent=1 // pred_fallthru
      _
    // Predicated region
    $region6: #{tpu_custom_call.1} parent=1 // pred_check
      _
    $region7: #{tpu_custom_call.1} parent=1 // pred_check_branch
      %27 = sbr.rel (0) target = $region9
    $region8: #{tpu_custom_call.1} parent=1 // pred_region
      _
    $region9: #{tpu_custom_call.1} parent=1 // pred_fallthru
      _
    // Predicated region
    $region10: #{tpu_custom_call.1} parent=1 // pred_check
      _
    $region11: #{tpu_custom_call.1} parent=1 // pred_check_branch
      %29 = sbr.rel (0) target = $region13
    $region12: #{tpu_custom_call.1} parent=1 // pred_region
      _
    $region13: #{tpu_custom_call.1} parent=1 // pred_fallthru
      _
    // Predicated region
    $region14: #{tpu_custom_call.1} parent=1 // pred_check
      _
    $region15: #{tpu_custom_call.1} parent=1 // pred_check_branch
      %31 = sbr.rel (0) target = $region17
    $region16: #{tpu_custom_call.1} parent=1 // pred_region
      %s33 = ssub.s32 512, 512
      %34 = vsyncadd [#allocation5], %s33
      %s35 = sshll.u32 [#allocation4], 4
      %s36 = int_to_ptr.vmem [resolvable:$true] %s35
      %41 = dma.hbm_to_vmem [thread:$0]  %s3, 512, %s36, [#allocation5], 128, 128, 8
    $region17: #{tpu_custom_call.1} parent=1 // pred_fallthru
      _
    // Predicated region
    $region18: #{tpu_custom_call.1} parent=1 // pred_check
      _
    $region19: #{tpu_custom_call.1} parent=1 // pred_check_branch
      %43 = sbr.rel (0) target = $region21
    $region20: #{tpu_custom_call.1} parent=1 // pred_region
      _
    $region21: #{tpu_custom_call.1} parent=1 // pred_fallthru
      _
    // Predicated region
    $region22: #{tpu_custom_call.1} parent=1 // pred_check
      _
    $region23: #{tpu_custom_call.1} parent=1 // pred_check_branch
      %45 = sbr.rel (0) target = $region25
    $region24: #{tpu_custom_call.1} parent=1 // pred_region
      _
    $region25: #{tpu_custom_call.1} parent=1 // pred_fallthru
      _
    // Predicated region
    $region26: #{tpu_custom_call.1} parent=1 // pred_check
      _
    $region27: #{tpu_custom_call.1} parent=1 // pred_check_branch
      %47 = sbr.rel (0) target = $region29
    $region28: #{tpu_custom_call.1} parent=1 // pred_region
      _
    $region29: #{tpu_custom_call.1} parent=1 // pred_fallthru
      _
    // Predicated region
    $region30: #{tpu_custom_call.1} parent=1 // pred_check
      _
    $region31: #{tpu_custom_call.1} parent=1 // pred_check_branch
      %49 = sbr.rel (0) target = $region33
    $region32: #{tpu_custom_call.1} parent=1 // pred_region
      %50 = dma.done [#allocation3], 256
    $region33: #{tpu_custom_call.1} parent=1 // pred_fallthru
      _
    // Predicated region
    $region34: #{tpu_custom_call.1} parent=1 // pred_check
      _
    $region35: #{tpu_custom_call.1} parent=1 // pred_check_branch
      %52 = sbr.rel (0) target = $region37
    $region36: #{tpu_custom_call.1} parent=1 // pred_region
      %53 = dma.done [#allocation5], 512
    $region37: #{tpu_custom_call.1} parent=1 // pred_fallthru
      _
    %v54 = vld [vmem:[#allocation2] sm:$0xff]
    %v55 = vld [vmem:[#allocation2 + $0x8] sm:$0xff]
    %v56 = vld [vmem:[%s1] sm:$0xff]
    %v57 = vld [vmem:[%s1 + $0x8] sm:$0xff]
    %v58 = vld [vmem:[%s1 + $0x10] sm:$0xff]
    %v59 = vld [vmem:[%s1 + $0x18] sm:$0xff]
    %v60 = vld [vmem:[%s2] sm:$0x1]
    %v62 = vlaneseq
    %v63 = vshrl.u32 %v62, 7
    %v64 = vsub.s32 0, %v63
    %v65 = vrot.slane %v60, %v64
    %vm67 = vcmask 261120
    %v69 = vsel %vm67, %v54, 0
    %v72 = vsel %vm67, %v55, 0
    %74 = vmatprep.subr.mxu0 0.0
    %75 = vmatpush1.msra.mxu0 0.0
    %76 = vmatprep.subr.mxu0 0.0
    %77 = vmatpush1.msra.mxu0 0.0
    %78 = vmatprep.subr.mxu0 0.0
    %79 = vmatpush1.msra.mxu0 0.0
    %80 = vmatprep.subr.mxu0 0.0
    %81 = vmatpush1.msra.mxu0 0.0
    %82 = vmatprep.subr.mxu0 0.0
    %83 = vmatpush1.msra.mxu0 0.0
    %84 = vmatprep.subr.mxu0 0.0
    %85 = vmatpush1.msra.mxu0 0.0
    %86 = vmatprep.subr.mxu0 0.0
    %87 = vmatpush1.msra.mxu0 0.0
    %88 = vmatprep.subr.mxu0 0.0
    %89 = vmatpush1.msra.mxu0 0.0
    %90 = vmatprep.subr.mxu0 0.0
    %91 = vmatpush1.msra.mxu0 0.0
    %92 = vmatprep.subr.mxu0 0.0
    %93 = vmatpush1.msra.mxu0 0.0
    %94 = vmatprep.subr.mxu0 0.0
    %95 = vmatpush1.msra.mxu0 0.0
    %96 = vmatprep.subr.mxu0 0.0
    %97 = vmatpush1.msra.mxu0 0.0
    %98 = vmatprep.subr.mxu0 0.0
    %99 = vmatpush1.msra.mxu0 %v59
    %100 = vmatprep.subr.mxu0 0.0
    %101 = vmatpush1.msra.mxu0 %v58
    %102 = vmatprep.subr.mxu0 0.0
    %103 = vmatpush1.msra.mxu0 %v57
    %104 = vmatprep.subr.mxu0 0.0
    %105 = vmatpush1.msra.mxu0 %v56
    %106 = vmatprep.subr.mxu0 0.0
    %107 = vmatpush2.msra.mxu0 0.0
    %108 = vmatprep.subr.mxu0 0.0
    %109 = vmatpush2.msra.mxu0 0.0
    %110 = vmatprep.subr.mxu0 0.0
    %111 = vmatpush2.msra.mxu0 0.0
    %112 = vmatprep.subr.mxu0 0.0
    %113 = vmatpush2.msra.mxu0 0.0
    %114 = vmatprep.subr.mxu0 0.0
    %115 = vmatpush2.msra.mxu0 0.0
    %116 = vmatprep.subr.mxu0 0.0
    %117 = vmatpush2.msra.mxu0 0.0
    %118 = vmatprep.subr.mxu0 0.0
    %119 = vmatpush2.msra.mxu0 0.0
    %120 = vmatprep.subr.mxu0 0.0
    %121 = vmatpush2.msra.mxu0 0.0
    %122 = vmatprep.subr.mxu0 0.0
    %123 = vmatpush2.msra.mxu0 0.0
    %124 = vmatprep.subr.mxu0 0.0
    %125 = vmatpush2.msra.mxu0 0.0
    %126 = vmatprep.subr.mxu0 0.0
    %127 = vmatpush2.msra.mxu0 0.0
    %128 = vmatprep.subr.mxu0 0.0
    %129 = vmatpush2.msra.mxu0 0.0
    %130 = vmatprep.subr.mxu0 0.0
    %131 = vmatpush2.msra.mxu0 0.0
    %132 = vmatprep.subr.mxu0 0.0
    %133 = vmatpush2.msra.mxu0 0.0
    %134 = vmatprep.subr.mxu0 0.0
    %135 = vmatpush2.msra.mxu0 0.0
    %136 = vmatprep.subr.mxu0 0.0
    %137 = vmatpush2.msra.mxu0 0.0
    %138 = vmatprep.mubr.f32.mxu0 0.0
    %139 = vmatmul.mubr.f32.gmra.mxu0 %v69
    %v140 = vpop.f32.mrf.mxu0
    %v141 = vadd.f32 %v65, %v140
    %v142 = vpop.f32.mrf.mxu0
    %143 = vmatprep.mubr.f32.mxu0 0.0
    %144 = vmatmul.mubr.f32.gmra.mxu0 %v72
    %v145 = vpop.f32.mrf.mxu0
    %v146 = vadd.f32 %v65, %v145
    %v147 = vpop.f32.mrf.mxu0
    %148 = vdwg.mxu0
    %v149 = vmax.f32 %v141, 0.0
    %v150 = vmax.f32 %v146, 0.0
    %v151 = vld [vmem:[#allocation4] sm:$0xff]
    %v152 = vld [vmem:[#allocation4 + $0x8] sm:$0xff]
    %v153 = vld [vmem:[#allocation4 + $0x10] sm:$0xff]
    %v154 = vld [vmem:[#allocation4 + $0x18] sm:$0xff]
    %v155 = vld [vmem:[%s4] sm:$0x1]
    %v157 = vlaneseq
    %v158 = vshrl.u32 %v157, 7
    %v159 = vsub.s32 0, %v158
    %v160 = vrot.slane %v155, %v159
    %v163 = vsel %vm67, %v149, 0
    %v166 = vsel %vm67, %v150, 0
    %168 = vmatprep.subr.mxu0 0.0
    %169 = vmatpush1.msra.mxu0 0.0
    %170 = vmatprep.subr.mxu0 0.0
    %171 = vmatpush1.msra.mxu0 0.0
    %172 = vmatprep.subr.mxu0 0.0
    %173 = vmatpush1.msra.mxu0 0.0
    %174 = vmatprep.subr.mxu0 0.0
    %175 = vmatpush1.msra.mxu0 0.0
    %176 = vmatprep.subr.mxu0 0.0
    %177 = vmatpush1.msra.mxu0 0.0
    %178 = vmatprep.subr.mxu0 0.0
    %179 = vmatpush1.msra.mxu0 0.0
    %180 = vmatprep.subr.mxu0 0.0
    %181 = vmatpush1.msra.mxu0 0.0
    %182 = vmatprep.subr.mxu0 0.0
    %183 = vmatpush1.msra.mxu0 0.0
    %184 = vmatprep.subr.mxu0 0.0
    %185 = vmatpush1.msra.mxu0 0.0
    %186 = vmatprep.subr.mxu0 0.0
    %187 = vmatpush1.msra.mxu0 0.0
    %188 = vmatprep.subr.mxu0 0.0
    %189 = vmatpush1.msra.mxu0 0.0
    %190 = vmatprep.subr.mxu0 0.0
    %191 = vmatpush1.msra.mxu0 0.0
    %192 = vmatprep.subr.mxu0 0.0
    %193 = vmatpush1.msra.mxu0 %v154
    %194 = vmatprep.subr.mxu0 0.0
    %195 = vmatpush1.msra.mxu0 %v153
    %196 = vmatprep.subr.mxu0 0.0
    %197 = vmatpush1.msra.mxu0 %v152
    %198 = vmatprep.subr.mxu0 0.0
    %199 = vmatpush1.msra.mxu0 %v151
    %200 = vmatprep.subr.mxu0 0.0
    %201 = vmatpush2.msra.mxu0 0.0
    %202 = vmatprep.subr.mxu0 0.0
    %203 = vmatpush2.msra.mxu0 0.0
    %204 = vmatprep.subr.mxu0 0.0
    %205 = vmatpush2.msra.mxu0 0.0
    %206 = vmatprep.subr.mxu0 0.0
    %207 = vmatpush2.msra.mxu0 0.0
    %208 = vmatprep.subr.mxu0 0.0
    %209 = vmatpush2.msra.mxu0 0.0
    %210 = vmatprep.subr.mxu0 0.0
    %211 = vmatpush2.msra.mxu0 0.0
    %212 = vmatprep.subr.mxu0 0.0
    %213 = vmatpush2.msra.mxu0 0.0
    %214 = vmatprep.subr.mxu0 0.0
    %215 = vmatpush2.msra.mxu0 0.0
    %216 = vmatprep.subr.mxu0 0.0
    %217 = vmatpush2.msra.mxu0 0.0
    %218 = vmatprep.subr.mxu0 0.0
    %219 = vmatpush2.msra.mxu0 0.0
    %220 = vmatprep.subr.mxu0 0.0
    %221 = vmatpush2.msra.mxu0 0.0
    %222 = vmatprep.subr.mxu0 0.0
    %223 = vmatpush2.msra.mxu0 0.0
    %224 = vmatprep.subr.mxu0 0.0
    %225 = vmatpush2.msra.mxu0 0.0
    %226 = vmatprep.subr.mxu0 0.0
    %227 = vmatpush2.msra.mxu0 0.0
    %228 = vmatprep.subr.mxu0 0.0
    %229 = vmatpush2.msra.mxu0 0.0
    %230 = vmatprep.subr.mxu0 0.0
    %231 = vmatpush2.msra.mxu0 0.0
    %232 = vmatprep.mubr.f32.mxu0 0.0
    %233 = vmatmul.mubr.f32.gmra.mxu0 %v163
    %v234 = vpop.f32.mrf.mxu0
    %v235 = vadd.f32 %v160, %v234
    %v236 = vpop.f32.mrf.mxu0
    %237 = vmatprep.mubr.f32.mxu0 0.0
    %238 = vmatmul.mubr.f32.gmra.mxu0 %v166
    %v239 = vpop.f32.mrf.mxu0
    %v240 = vadd.f32 %v160, %v239
    %v241 = vpop.f32.mrf.mxu0
    %242 = vdwg.mxu0
    %v243 = vmax.f32 %v235, 0.0
    %v244 = vmax.f32 %v240, 0.0
    %v245 = vld [vmem:[%s5] sm:$0xff]
    %v246 = vld [vmem:[%s5 + $0x8] sm:$0xff]
    %v247 = vld [vmem:[%s5 + $0x10] sm:$0xff]
    %v248 = vld [vmem:[%s5 + $0x18] sm:$0xff]
    %v249 = vld [vmem:[%s6] sm:$0x1]
    %v251 = vlaneseq
    %v252 = vshrl.u32 %v251, 7
    %v253 = vsub.s32 0, %v252
    %v254 = vrot.slane %v249, %v253
    %v257 = vsel %vm67, %v243, 0
    %v260 = vsel %vm67, %v244, 0
    %262 = vmatprep.subr.mxu0 0.0
    %263 = vmatpush1.msra.mxu0 0.0
    %264 = vmatprep.subr.mxu0 0.0
    %265 = vmatpush1.msra.mxu0 0.0
    %266 = vmatprep.subr.mxu0 0.0
    %267 = vmatpush1.msra.mxu0 0.0
    %268 = vmatprep.subr.mxu0 0.0
    %269 = vmatpush1.msra.mxu0 0.0
    %270 = vmatprep.subr.mxu0 0.0
    %271 = vmatpush1.msra.mxu0 0.0
    %272 = vmatprep.subr.mxu0 0.0
    %273 = vmatpush1.msra.mxu0 0.0
    %274 = vmatprep.subr.mxu0 0.0
    %275 = vmatpush1.msra.mxu0 0.0
    %276 = vmatprep.subr.mxu0 0.0
    %277 = vmatpush1.msra.mxu0 0.0
    %278 = vmatprep.subr.mxu0 0.0
    %279 = vmatpush1.msra.mxu0 0.0
    %280 = vmatprep.subr.mxu0 0.0
    %281 = vmatpush1.msra.mxu0 0.0
    %282 = vmatprep.subr.mxu0 0.0
    %283 = vmatpush1.msra.mxu0 0.0
    %284 = vmatprep.subr.mxu0 0.0
    %285 = vmatpush1.msra.mxu0 0.0
    %286 = vmatprep.subr.mxu0 0.0
    %287 = vmatpush1.msra.mxu0 %v248
    %288 = vmatprep.subr.mxu0 0.0
    %289 = vmatpush1.msra.mxu0 %v247
    %290 = vmatprep.subr.mxu0 0.0
    %291 = vmatpush1.msra.mxu0 %v246
    %292 = vmatprep.subr.mxu0 0.0
    %293 = vmatpush1.msra.mxu0 %v245
    %294 = vmatprep.subr.mxu0 0.0
    %295 = vmatpush2.msra.mxu0 0.0
    %296 = vmatprep.subr.mxu0 0.0
    %297 = vmatpush2.msra.mxu0 0.0
    %298 = vmatprep.subr.mxu0 0.0
    %299 = vmatpush2.msra.mxu0 0.0
    %300 = vmatprep.subr.mxu0 0.0
    %301 = vmatpush2.msra.mxu0 0.0
    %302 = vmatprep.subr.mxu0 0.0
    %303 = vmatpush2.msra.mxu0 0.0
    %304 = vmatprep.subr.mxu0 0.0
    %305 = vmatpush2.msra.mxu0 0.0
    %306 = vmatprep.subr.mxu0 0.0
    %307 = vmatpush2.msra.mxu0 0.0
    %308 = vmatprep.subr.mxu0 0.0
    %309 = vmatpush2.msra.mxu0 0.0
    %310 = vmatprep.subr.mxu0 0.0
    %311 = vmatpush2.msra.mxu0 0.0
    %312 = vmatprep.subr.mxu0 0.0
    %313 = vmatpush2.msra.mxu0 0.0
    %314 = vmatprep.subr.mxu0 0.0
    %315 = vmatpush2.msra.mxu0 0.0
    %316 = vmatprep.subr.mxu0 0.0
    %317 = vmatpush2.msra.mxu0 0.0
    %318 = vmatprep.subr.mxu0 0.0
    %319 = vmatpush2.msra.mxu0 0.0
    %320 = vmatprep.subr.mxu0 0.0
    %321 = vmatpush2.msra.mxu0 0.0
    %322 = vmatprep.subr.mxu0 0.0
    %323 = vmatpush2.msra.mxu0 0.0
    %324 = vmatprep.subr.mxu0 0.0
    %325 = vmatpush2.msra.mxu0 0.0
    %326 = vmatprep.mubr.f32.mxu0 0.0
    %327 = vmatmul.mubr.f32.gmra.mxu0 %v257
    %v328 = vpop.f32.mrf.mxu0
    %v329 = vadd.f32 %v254, %v328
    %v330 = vpop.f32.mrf.mxu0
    %331 = vmatprep.mubr.f32.mxu0 0.0
    %332 = vmatmul.mubr.f32.gmra.mxu0 %v260
    %v333 = vpop.f32.mrf.mxu0
    %v334 = vadd.f32 %v254, %v333
    %v335 = vpop.f32.mrf.mxu0
    %336 = vdwg.mxu0
    %vm337 = vcmask 64512
    %338 = vst.msk [vmem:[%s7] sm:$0xff] %vm337, %v329
    %339 = vst.msk [vmem:[%s7 + $0x8] sm:$0xff] %vm337, %v334
    // Predicated region
    $region38: #{tpu_custom_call.1} parent=1 // pred_check
      _
    $region39: #{tpu_custom_call.1} parent=1 // pred_check_branch
      %341 = sbr.rel (0) target = $region41
    $region40: #{tpu_custom_call.1} parent=1 // pred_region
      _
    $region41: #{tpu_custom_call.1} parent=1 // pred_fallthru
      _
    // Predicated region
    $region42: #{tpu_custom_call.1} parent=1 // pred_check
      _
    $region43: #{tpu_custom_call.1} parent=1 // pred_check_branch
      %343 = sbr.rel (0) target = $region45
    $region44: #{tpu_custom_call.1} parent=1 // pred_region
      _
    $region45: #{tpu_custom_call.1} parent=1 // pred_fallthru
      _
    %344 = vsyncpa [#allocation3], 1
    %345 = vsyncpa [#allocation5], 1

</llo_original>
